<compile_context>
chip_gen: v7x
topology: tpu7x:2x2x1
jax: 0.10.0
libtpu: 0.0.40
codegen_flags: <defaults>
</compile_context>

<pallas_src>
import functools

import jax
import jax.numpy as jnp
from jax import lax
from jax.experimental import pallas as pl
from jax.experimental.pallas import tpu as pltpu

_LANES = 128


def _round_up(x, m):
    return ((x + m - 1) // m) * m


def _vmem_limit_bytes():
    """Scoped-VMEM limit sized per generation (64 MiB/TC on v7x, 128 MiB elsewhere)."""
    cap = 64 * 1024 * 1024
    try:
        cap = int(pltpu.get_tpu_info().vmem_capacity_bytes)
    except Exception:
        pass
    return min(cap * 3 // 4, 96 * 1024 * 1024)


def _num_tensorcores():
    """2 on dual-TensorCore parts (v7x / megacore), else 1. Defensive: default 1."""
    try:
        return max(1, int(getattr(jax.devices()[0], "num_cores", 1)))
    except Exception:
        return 1


def _lane_dense_kernel(out_ref, dmap_ref, partial_ref, *, valid_rows, tile_rows,
                       t_per_g, mask):
    # out_ref, dmap_ref : (B, TR, 128) native-dtype tiles streamed from HBM.
    # partial_ref       : (1, B, 128) f32 accumulator, VMEM-resident across ti.
    ti = pl.program_id(1)

    @pl.when(ti == 0)
    def _():
        partial_ref[...] = jnp.zeros_like(partial_ref)

    diff = out_ref[...].astype(jnp.float32) - dmap_ref[...].astype(jnp.float32)
    if mask:  # static: only emitted when the grid over-covers the row range.
        tile_idx = pl.program_id(0) * t_per_g + ti
        rows = tile_idx * tile_rows + lax.broadcasted_iota(jnp.int32, diff.shape, 1)
        diff = jnp.where(rows < valid_rows, diff, 0.0)
    partial_ref[...] += jnp.sum(diff, axis=1)[None]


def _flat_kernel(out_ref, dmap_ref, partial_ref, *, valid_cols, tile_cols,
                 t_per_g, mask):
    # out_ref, dmap_ref : (B, TN) native-dtype tiles streamed from HBM.
    # partial_ref       : (1, B, 1) f32 accumulator, VMEM-resident across ti.
    ti = pl.program_id(1)

    @pl.when(ti == 0)
    def _():
        partial_ref[...] = jnp.zeros_like(partial_ref)

    diff = out_ref[...].astype(jnp.float32) - dmap_ref[...].astype(jnp.float32)
    if mask:  # static: masks the ragged lane tail of the last tile.
        tile_idx = pl.program_id(0) * t_per_g + ti
        cols = tile_idx * tile_cols + lax.broadcasted_iota(jnp.int32, diff.shape, 1)
        diff = jnp.where(cols < valid_cols, diff, 0.0)
    partial_ref[...] += jnp.sum(diff, axis=1, keepdims=True)[None]


def count_loss_ref(output, dmap):
    """Pure-JAX reference mirroring the PyTorch forward (f32 accumulation)."""
    so = output.reshape(output.shape[0], -1).astype(jnp.float32).sum(axis=1)
    sd = dmap.reshape(dmap.shape[0], -1).astype(jnp.float32).sum(axis=1)
    return jnp.mean(jnp.square(so - sd))


def count_loss(output, dmap, *, min_pallas_bytes=2 * 1024 * 1024):
    """Pallas equivalent of CountLoss.forward(output, dmap). Returns scalar f32."""
    assert output.shape == dmap.shape
    b = output.shape[0]
    n = 1
    for d in output.shape[1:]:
        n *= d

    # Stream low-precision floats natively; anything else goes through f32 once.
    if str(output.dtype) not in ("float32", "bfloat16", "float16") or output.dtype != dmap.dtype:
        output = output.astype(jnp.float32)
        dmap = dmap.astype(jnp.float32)
    itemsize = output.dtype.itemsize
    sub = max(8, 32 // itemsize)  # sublane multiple for this dtype's packing

    # Small-input fast path: launch/pipeline overhead dominates, let XLA fuse it.
    if n == 0 or 2 * b * n * itemsize < min_pallas_bytes:
        return count_loss_ref(output, dmap)

    vmem_limit = _vmem_limit_bytes()
    buf_budget = vmem_limit // 6  # 2 inputs x 2 pipeline buffers + headroom
    g = 2 if _num_tensorcores() >= 2 else 1

    out2d = jnp.reshape(output, (b, n))
    dmap2d = jnp.reshape(dmap, (b, n))

    if n % _LANES == 0:
        # Lane-dense path: free reshape to (B, R, 128); every (8,128) vreg fully used.
        r = n // _LANES
        rows_budget = buf_budget // (b * _LANES * itemsize)
        if rows_budget < sub:
            # TODO(synk): very large batch; tile over the batch dim instead of bailing out.
            return count_loss_ref(output, dmap)
        tr = min(_round_up(r, sub), (rows_budget // sub) * sub)
        total_tiles = pl.cdiv(r, tr)
        if total_tiles < 2:
            g = 1
        t_per_g = pl.cdiv(total_tiles, g)
        mask = (g * t_per_g * tr) != r
        last_blk = total_tiles - 1

        out3d = out2d.reshape(b, r, _LANES)
        dmap3d = dmap2d.reshape(b, r, _LANES)
        kernel = functools.partial(_lane_dense_kernel, valid_rows=r, tile_rows=tr,
                                   t_per_g=t_per_g, mask=mask)
        # Clamp the block index so an over-covering tile of a short group re-reads an
        # in-bounds tile; its contribution is zeroed by the in-kernel row mask.
        in_map = lambda gi, ti: (0, jnp.minimum(gi * t_per_g + ti, last_blk), 0)

        # TODO(synk): on v7x a measured win might come from pipeline_mode=pl.Buffered(3);
        # kept at the default double-buffering pending a trace.
        partials = pl.pallas_call(
            kernel,
            out_shape=jax.ShapeDtypeStruct((g, b, _LANES), jnp.float32),
            grid=(g, t_per_g),
            in_specs=[pl.BlockSpec((b, tr, _LANES), in_map),
                      pl.BlockSpec((b, tr, _LANES), in_map)],
            out_specs=pl.BlockSpec((1, b, _LANES), lambda gi, ti: (gi, 0, 0)),
            compiler_params=pltpu.CompilerParams(
                dimension_semantics=("parallel", "arbitrary"),
                vmem_limit_bytes=vmem_limit),
            cost_estimate=pl.CostEstimate(
                flops=3 * b * n, transcendentals=0,
                bytes_accessed=2 * b * n * itemsize + g * b * _LANES * 4),
        )(out3d, dmap3d)
    else:
        # Ragged path: stream the flat (B, N) layout directly and mask the lane tail
        # in-kernel — no jnp.pad copy of the inputs.
        cols_budget = buf_budget // (_round_up(b, sub) * itemsize)
        if cols_budget < _LANES:
            # TODO(synk): very large batch; tile over the batch dim instead of bailing out.
            return count_loss_ref(output, dmap)
        tn = min(_round_up(n, _LANES), (cols_budget // _LANES) * _LANES)
        total_tiles = pl.cdiv(n, tn)
        if total_tiles < 2:
            g = 1
        t_per_g = pl.cdiv(total_tiles, g)
        mask = (g * t_per_g * tn) != n
        last_blk = total_tiles - 1

        kernel = functools.partial(_flat_kernel, valid_cols=n, tile_cols=tn,
                                   t_per_g=t_per_g, mask=mask)
        in_map = lambda gi, ti: (0, jnp.minimum(gi * t_per_g + ti, last_blk))

        partials = pl.pallas_call(
            kernel,
            out_shape=jax.ShapeDtypeStruct((g, b, 1), jnp.float32),
            grid=(g, t_per_g),
            in_specs=[pl.BlockSpec((b, tn), in_map),
                      pl.BlockSpec((b, tn), in_map)],
            out_specs=pl.BlockSpec((1, b, 1), lambda gi, ti: (gi, 0, 0)),
            compiler_params=pltpu.CompilerParams(
                dimension_semantics=("parallel", "arbitrary"),
                vmem_limit_bytes=vmem_limit),
            cost_estimate=pl.CostEstimate(
                flops=3 * b * n, transcendentals=0,
                bytes_accessed=2 * b * n * itemsize + g * b * 4),
        )(out2d, dmap2d)

    # Tiny finalize: per-sample (sum(out) - sum(dmap)), then MSE over the true batch.
    per_sample = jnp.sum(partials, axis=(0, 2))  # (B,)
    return jnp.mean(jnp.square(per_sample))


if __name__ == "__main__":
    key = jax.random.PRNGKey(0)
    k1, k2 = jax.random.split(key)

    # 1) Small NCHW density maps, f32, lane-aligned (C*H*W = 1024). Force Pallas path.
    out_f32 = jax.random.uniform(k1, (2, 4, 16, 16), dtype=jnp.float32)
    dmap_f32 = jax.random.uniform(k2, (2, 4, 16, 16), dtype=jnp.float32)
    loss = jax.block_until_ready(count_loss(out_f32, dmap_f32, min_pallas_bytes=0))
    ref = jax.block_until_ready(count_loss_ref(out_f32, dmap_f32))
    assert jnp.allclose(loss, ref, rtol=1e-3, atol=1e-6), (loss, ref)

    # 2) Native bf16 streaming (cast to f32 inside the kernel, no wrapper copy).
    loss = jax.block_until_ready(count_loss(out_f32.astype(jnp.bfloat16),
                                            dmap_f32.astype(jnp.bfloat16),
                                            min_pallas_bytes=0))
    ref = jax.block_until_ready(count_loss_ref(out_f32.astype(jnp.bfloat16),
                                               dmap_f32.astype(jnp.bfloat16)))
    assert jnp.allclose(loss, ref, rtol=1e-3, atol=1e-6), (loss, ref)

    # 3) Lane-aligned but ragged rows (R = 10 rows vs an 8/16-row tile): row masking.
    o3 = jax.random.uniform(k1, (2, 4, 20, 16), dtype=jnp.float32)
    d3 = jax.random.uniform(k2, (2, 4, 20, 16), dtype=jnp.float32)
    loss = jax.block_until_ready(count_loss(o3, d3, min_pallas_bytes=0))
    ref = jax.block_until_ready(count_loss_ref(o3, d3))
    assert jnp.allclose(loss, ref, rtol=1e-3, atol=1e-6), (loss, ref)

    # 4) C*H*W not a multiple of 128: flat path with in-kernel lane masking (no jnp.pad).
    o4 = jax.random.uniform(k1, (2, 3, 15, 15), dtype=jnp.float32)
    d4 = jax.random.uniform(k2, (2, 3, 15, 15), dtype=jnp.float32)
    loss = jax.block_until_ready(count_loss(o4, d4, min_pallas_bytes=0))
    ref = jax.block_until_ready(count_loss_ref(o4, d4))
    assert jnp.allclose(loss, ref, rtol=1e-3, atol=1e-6), (loss, ref)

    # 5) Default small-input fast path (pure JAX, no kernel launch).
    loss = jax.block_until_ready(count_loss(out_f32, dmap_f32))
    ref = jax.block_until_ready(count_loss_ref(out_f32, dmap_f32))
    assert jnp.allclose(loss, ref, rtol=1e-3, atol=1e-6), (loss, ref)

    print("KERNEL_OK")
</pallas_src>

<mosaic_0001>
module attributes {stable_mosaic.version = 11 : i64} {
  func.func @_lane_dense_kernel(%arg0: i32, %arg1: i32, %arg2: memref<2x8x128xf32, #tpu.memory_space<vmem>>, %arg3: memref<2x8x128xf32, #tpu.memory_space<vmem>>, %arg4: memref<1x2x128xf32, #tpu.memory_space<vmem>>) attributes {dimension_semantics = [#tpu.dimension_semantics<parallel>, #tpu.dimension_semantics<arbitrary>], iteration_bounds = array<i64: 1, 1>, scalar_prefetch = 0 : i64, scratch_operands = 0 : i64, tpu.core_type = #tpu.core_type<tc>, window_params = [{transform_indices = @transform_0, window_bounds = array<i64: 2, 8, 128>}, {transform_indices = @transform_1, window_bounds = array<i64: 2, 8, 128>}, {transform_indices = @transform_2, window_bounds = array<i64: 1, 2, 128>}]} {
    %c0_i32 = arith.constant 0 : i32
    %0 = arith.cmpi eq, %arg1, %c0_i32 : i32
    %1 = arith.extui %0 : i1 to i32
    %c0_i32_0 = arith.constant 0 : i32
    %2 = arith.cmpi ne, %1, %c0_i32_0 : i32
    scf.if %2 {
      %cst_12 = arith.constant 0.000000e+00 : f32
      %11 = vector.broadcast %cst_12 : f32 to vector<1x2x128xf32>
      %c0_13 = arith.constant 0 : index
      %c0_14 = arith.constant 0 : index
      %c0_15 = arith.constant 0 : index
      %12 = vector.load %arg4[%c0_13, %c0_14, %c0_15] : memref<1x2x128xf32, #tpu.memory_space<vmem>>, vector<1x2x128xf32>
      tpu.vector_store %arg4[%c0_13, %c0_14, %c0_15], %11 {strides = array<i32>} : memref<1x2x128xf32, #tpu.memory_space<vmem>>, vector<1x2x128xf32>,
    } else {
    }
    %c0 = arith.constant 0 : index
    %c0_1 = arith.constant 0 : index
    %c0_2 = arith.constant 0 : index
    %3 = vector.load %arg2[%c0, %c0_1, %c0_2] : memref<2x8x128xf32, #tpu.memory_space<vmem>>, vector<2x8x128xf32>
    %c0_3 = arith.constant 0 : index
    %c0_4 = arith.constant 0 : index
    %c0_5 = arith.constant 0 : index
    %4 = vector.load %arg3[%c0_3, %c0_4, %c0_5] : memref<2x8x128xf32, #tpu.memory_space<vmem>>, vector<2x8x128xf32>
    %5 = arith.subf %3, %4 : vector<2x8x128xf32>
    %c0_6 = arith.constant 0 : index
    %c0_7 = arith.constant 0 : index
    %c0_8 = arith.constant 0 : index
    %6 = vector.load %arg4[%c0_6, %c0_7, %c0_8] : memref<1x2x128xf32, #tpu.memory_space<vmem>>, vector<1x2x128xf32>
    %cst = arith.constant dense<0.000000e+00> : vector<2x128xf32>
    %7 = vector.multi_reduction <add>, %5, %cst [1] : vector<2x8x128xf32> to vector<2x128xf32>
    %8 = vector.shape_cast %7 : vector<2x128xf32> to vector<1x2x128xf32>
    %9 = arith.addf %6, %8 : vector<1x2x128xf32>
    %c0_9 = arith.constant 0 : index
    %c0_10 = arith.constant 0 : index
    %c0_11 = arith.constant 0 : index
    %10 = vector.load %arg4[%c0_9, %c0_10, %c0_11] : memref<1x2x128xf32, #tpu.memory_space<vmem>>, vector<1x2x128xf32>
    tpu.vector_store %arg4[%c0_9, %c0_10, %c0_11], %9 {strides = array<i32>} : memref<1x2x128xf32, #tpu.memory_space<vmem>>, vector<1x2x128xf32>,
    return
  }
  func.func @transform_0(%arg0: i32, %arg1: i32) -> (i32, i32, i32) {
    %c1_i32 = arith.constant 1 : i32
    %0 = arith.muli %arg0, %c1_i32 : i32
    %1 = arith.addi %0, %arg1 : i32
    %c0_i32 = arith.constant 0 : i32
    %2 = arith.minsi %1, %c0_i32 : i32
    %c0_i32_0 = arith.constant 0 : i32
    %c0_i32_1 = arith.constant 0 : i32
    %c0_i32_2 = arith.constant 0 : i32
    return %c0_i32_0, %2, %c0_i32_1 : i32, i32, i32
  }
  func.func @transform_1(%arg0: i32, %arg1: i32) -> (i32, i32, i32) {
    %c1_i32 = arith.constant 1 : i32
    %0 = arith.muli %arg0, %c1_i32 : i32
    %1 = arith.addi %0, %arg1 : i32
    %c0_i32 = arith.constant 0 : i32
    %2 = arith.minsi %1, %c0_i32 : i32
    %c0_i32_0 = arith.constant 0 : i32
    %c0_i32_1 = arith.constant 0 : i32
    %c0_i32_2 = arith.constant 0 : i32
    return %c0_i32_0, %2, %c0_i32_1 : i32, i32, i32
  }
  func.func @transform_2(%arg0: i32, %arg1: i32) -> (i32, i32, i32) {
    %c0_i32 = arith.constant 0 : i32
    %c0_i32_0 = arith.constant 0 : i32
    %c0_i32_1 = arith.constant 0 : i32
    return %arg0, %c0_i32, %c0_i32_0 : i32, i32, i32
  }
}

</mosaic_0001>

<llo_original>
// kernel: tpu_custom_call.1
$region0: #{tpu_custom_call.1}
  #allocation0 [shape = 'u32[]', space=smem, size = 0x4, offset = 0x4, fixed_abs, tag = 'smem constant byte address 0x4 - core index']
  #allocation1 [shape = 'u32[144,128]{1,0:T(1,128)}', space=vmem, size = 0x12000, scoped, tag = 'internal scratch']
  %s0 = inlined_call_operand.hbm [shape: f32[2,8,128], index: 0, kind: input, shape index: {}]
  %s1 = inlined_call_operand.hbm [shape: f32[2,8,128], index: 1, kind: input, shape index: {}]
  %s2 = inlined_call_operand.hbm [shape: f32[1,2,128], index: 2, kind: output, shape index: {}]
  %s3 = sld [smem:[#allocation0]]
  $region30: #{tpu_custom_call.1} parent=0
    _
  %s5 = ssub.s32 1, %s3
  %s6 = scalar_select 0, %s5, %s3
  $region1: #{tpu_custom_call.1} parent=0
    #allocation2 [shape = 'u8[8192]{0}', space=vmem, size = 0x2000, scoped, tag = 'input window, operand 0, single buffered']
    #allocation3 [shape = 's32[1]{0}', space=sflag, size = 0x4, scoped, tag = 'scoped memory for tpu_custom_call.1']
    #allocation4 [shape = 's32[1]{0}', space=sflag, size = 0x4, scoped, tag = 'scoped memory for tpu_custom_call.1']
    #allocation5 [shape = 'u8[8192]{0}', space=vmem, size = 0x2000, scoped, tag = 'input window, operand 1, single buffered']
    #allocation6 [shape = 's32[1]{0}', space=sflag, size = 0x4, scoped, tag = 'scoped memory for tpu_custom_call.1']
    #allocation7 [shape = 'u8[1024]{0}', space=vmem, size = 0x400, scoped, tag = 'output window, operand 0, single buffered']
    %7 = vsyncpa [#allocation3], 0
    %8 = vsyncpa [#allocation6], 0
    %9 = vsyncpa [#allocation4], 0
    // Predicated region
    $region2: #{tpu_custom_call.1} parent=1 // pred_check
      _
    $region3: #{tpu_custom_call.1} parent=1 // pred_check_branch
      %11 = sbr.rel (0) target = $region5
    $region4: #{tpu_custom_call.1} parent=1 // pred_region
      %s12 = sadd.s32 0, 0
      %p13 = scmp.lt.s32.totalorder %s12, 0
      %s14 = scalar_select %p13, %s12, 0
      %s16 = ssub.s32 256, 256
      %17 = vsyncadd [#allocation3], %s16
      %s18 = smul.addr %s14, 128
      %s19 = scalar_lea.hbm %s0, %s18
      %s20 = sshll.u32 [#allocation2], 4
      %s21 = int_to_ptr.vmem [resolvable:$true] %s20
      %26 = dma.hbm_to_vmem [thread:$0]  %s19, 256, %s21, [#allocation3], 128, 128, 8
    $region5: #{tpu_custom_call.1} parent=1 // pred_fallthru
      _
    // Predicated region
    $region6: #{tpu_custom_call.1} parent=1 // pred_check
      _
    $region7: #{tpu_custom_call.1} parent=1 // pred_check_branch
      %28 = sbr.rel (0) target = $region9
    $region8: #{tpu_custom_call.1} parent=1 // pred_region
      %s29 = sadd.s32 0, 0
      %p30 = scmp.lt.s32.totalorder %s29, 0
      %s31 = scalar_select %p30, %s29, 0
      %s33 = ssub.s32 256, 256
      %34 = vsyncadd [#allocation6], %s33
      %s35 = smul.addr %s31, 128
      %s36 = scalar_lea.hbm %s1, %s35
      %s37 = sshll.u32 [#allocation5], 4
      %s38 = int_to_ptr.vmem [resolvable:$true] %s37
      %43 = dma.hbm_to_vmem [thread:$0]  %s36, 256, %s38, [#allocation6], 128, 128, 8
    $region9: #{tpu_custom_call.1} parent=1 // pred_fallthru
      _
    // Predicated region
    $region10: #{tpu_custom_call.1} parent=1 // pred_check
      _
    $region11: #{tpu_custom_call.1} parent=1 // pred_check_branch
      %45 = sbr.rel (0) target = $region13
    $region12: #{tpu_custom_call.1} parent=1 // pred_region
      %46 = dma.done [#allocation3], 256
    $region13: #{tpu_custom_call.1} parent=1 // pred_fallthru
      _
    // Predicated region
    $region14: #{tpu_custom_call.1} parent=1 // pred_check
      _
    $region15: #{tpu_custom_call.1} parent=1 // pred_check_branch
      %48 = sbr.rel (0) target = $region17
    $region16: #{tpu_custom_call.1} parent=1 // pred_region
      %49 = dma.done [#allocation6], 256
    $region17: #{tpu_custom_call.1} parent=1 // pred_fallthru
      _
    %s50 = sadd.s32 0, 0
    %p51 = scmp.lt.s32.totalorder %s50, 0
    %s52 = scalar_select %p51, %s50, 0
    %s53 = sadd.s32 0, 0
    %p54 = scmp.lt.s32.totalorder %s53, 0
    %s55 = scalar_select %p54, %s53, 0
    %p56 = scmp.eq.s32.totalorder 0, 0
    // Predicated region
    $region18: #{tpu_custom_call.1} parent=1 // pred_check
      %p57 = pneg %p56
    $region19: #{tpu_custom_call.1} parent=1 // pred_check_branch
      %59 = sbr.rel (%p57) target = $region21
    $region20: #{tpu_custom_call.1} parent=1 // pred_region
      %60 = vst [vmem:[#allocation7] sm:$0x3] 0.0
    $region21: #{tpu_custom_call.1} parent=1 // pred_fallthru
      _
    %v61 = vld [vmem:[#allocation2] sm:$0xff]
    %v62 = vld [vmem:[#allocation2 + $0x8] sm:$0xff]
    %v63 = vld [vmem:[#allocation5] sm:$0xff]
    %v64 = vld [vmem:[#allocation5 + $0x8] sm:$0xff]
    %v65 = vsub.f32 %v61, %v63
    %v66 = vsub.f32 %v62, %v64
    %v67 = vld [vmem:[#allocation7] sm:$0x3]
    %v68 = vrot.slane %v65, 4
    %v69 = vadd.f32 %v65, %v68
    %v70 = vrot.slane %v69, 2
    %v71 = vadd.f32 %v69, %v70
    %v72 = vrot.slane %v71, 1
    %v73 = vadd.f32 %v71, %v72
    %v74 = vrot.slane %v66, 4
    %v75 = vadd.f32 %v66, %v74
    %v76 = vrot.slane %v75, 2
    %v77 = vadd.f32 %v75, %v76
    %v78 = vrot.slane %v77, 1
    %v79 = vadd.f32 %v77, %v78
    %vm82 = vcmask 1041409
    %v83 = vsel %vm82, %v79, %v73
    %v85 = vadd.f32 %v67, %v83
    %86 = vst [vmem:[#allocation7] sm:$0x3] %v85
    // Predicated region
    $region22: #{tpu_custom_call.1} parent=1 // pred_check
      _
    $region23: #{tpu_custom_call.1} parent=1 // pred_check_branch
      %88 = sbr.rel (0) target = $region25
    $region24: #{tpu_custom_call.1} parent=1 // pred_region
      %s90 = ssub.s32 32, 32
      %91 = vsyncadd [#allocation4], %s90
      %s93 = sshll.u32 [#allocation7], 4
      %s94 = int_to_ptr.vmem [resolvable:$true] %s93
      %96 = dma.vmem_to_hbm [thread:$0]  %s94, 32, %s2, [#allocation4]
    $region25: #{tpu_custom_call.1} parent=1 // pred_fallthru
      _
    // Predicated region
    $region26: #{tpu_custom_call.1} parent=1 // pred_check
      _
    $region27: #{tpu_custom_call.1} parent=1 // pred_check_branch
      %98 = sbr.rel (0) target = $region29
    $region28: #{tpu_custom_call.1} parent=1 // pred_region
      %99 = dma.done [#allocation4], 32
    $region29: #{tpu_custom_call.1} parent=1 // pred_fallthru
      _
    %100 = vsyncpa [#allocation3], 1
    %101 = vsyncpa [#allocation6], 1
    %102 = vsyncpa [#allocation4], 1

</llo_original>
